<compile_context>
chip_gen: v5e
topology: v5e:2x2
jax: 0.10.0
libtpu: 0.0.40
codegen_flags: <defaults>
</compile_context>

<pallas_src>
import math

import jax
import jax.numpy as jnp
from jax import lax
from jax.experimental import pallas as pl
from jax.experimental.pallas import tpu as pltpu


# ----------------------------- Pallas kernel --------------------------------

def _head_kernel(x_ref, pw_ref, wb1_ref, wb2_ref, o_ref):
    """pool(1x1 conv) -> flatten(torch order) -> Linear -> ReLU -> Linear."""
    B, Cb, HW = x_ref.shape            # backbone feature map, spatial flattened
    pc = pw_ref.shape[0]               # pool output channels (small, static)
    K = pc * HW                        # fc1 fan-in in torch flatten order (p, hw)
    H = wb1_ref.shape[1]               # fc hidden size

    xv = x_ref[...]                            # (B, Cb, HW)
    pw = pw_ref[...].astype(xv.dtype)          # (pc, Cb)
    wb1 = wb1_ref[...]                         # (K+8, H): rows [0:K]=fc1_w^T, row K=bias
    wb2 = wb2_ref[...]                         # (H+8, O): rows [0:H]=fc2_w^T, row H=bias

    # 1x1 conv == per-pixel channel matmul, done as ONE batched matmul:
    #   pooled[b, p, hw] = sum_c pw[p, c] * x[b, c, hw]        (bias folded into fc1)
    pwb = jnp.broadcast_to(pw[None, :, :], (B, pc, Cb))
    pooled = lax.dot_general(
        pwb, xv,
        dimension_numbers=(((2,), (1,)), ((0,), (0,))),
        preferred_element_type=jnp.float32)                    # (B, pc, HW)

    # fc1 in torch flatten order (index = p*HW + hw) without materializing the
    # flattened feature vector: accumulate one small matmul per pooled channel.
    acc = jnp.zeros((B, H), jnp.float32)
    for p in range(pc):                                        # unrolled, pc is tiny
        acc = acc + jnp.dot(pooled[:, p, :], wb1[p * HW:(p + 1) * HW, :],
                            preferred_element_type=jnp.float32)
    h = jnp.maximum(acc + wb1[K:K + 1, :], 0.0)                # bias row + ReLU

    # fc2; the final (B, out_dim) store is the only lane-sparse write left.
    o = jnp.dot(h, wb2[:H, :], preferred_element_type=jnp.float32) + wb2[H:H + 1, :]
    o_ref[...] = o.astype(o_ref.dtype)


# ------------------------- one-time parameter prep ---------------------------

def prepare_head_params(params, param_dtype=jnp.float32):
    """One-time prep (outside the hot path).

    * Folds the pool bias exactly into fc1's bias (pool_b is constant over batch
      and spatial position), so the pool stays a bias-free in-kernel matmul.
    * Packs each Linear's bias as an extra 8-row-aligned block of its
      pre-transposed (K, N) weight, cutting the kernel to 4 VMEM operands.
    * `param_dtype=jnp.bfloat16` halves weight DMA bytes for deployment-sized
      heads (kernel keeps f32 accumulation via preferred_element_type).
    """
    pw = jnp.asarray(params["pool_w"])     # (pc, Cb)  = torch conv weight[:, :, 0, 0]
    pb = jnp.asarray(params["pool_b"])     # (pc,)
    w1 = jnp.asarray(params["fc1_w"])      # (H, pc*HW) torch Linear layout
    b1 = jnp.asarray(params["fc1_b"])      # (H,)
    w2 = jnp.asarray(params["fc2_w"])      # (O, H)
    b2 = jnp.asarray(params["fc2_b"])      # (O,)

    pc = pw.shape[0]
    hdim, k = w1.shape
    odim = w2.shape[0]
    hw = k // pc
    assert pc * hw == k, "fc1 fan-in must equal pool_channels * Hf * Wf"

    # b1_eff[j] = b1[j] + sum_{p,hw} fc1_w[j, p*HW+hw] * pool_b[p]
    w1_3d = w1.reshape(hdim, pc, hw)
    b1_eff = b1 + jnp.einsum("jph,p->j", w1_3d, pb)

    # Pre-transposed weight + bias row, zero-padded to an 8-row boundary so the
    # static in-kernel slices stay sublane-tile aligned.
    wb1 = jnp.zeros((k + 8, hdim), jnp.float32).at[:k].set(w1.T).at[k].set(b1_eff)
    wb2 = jnp.zeros((hdim + 8, odim), jnp.float32).at[:hdim].set(w2.T).at[hdim].set(b2)

    return {
        "pool_w": pw.astype(param_dtype),
        "wb1": wb1.astype(param_dtype),
        "wb2": wb2.astype(param_dtype),
    }


# --------------------------------- forward -----------------------------------

def regression_net_forward(x_feat, prep):
    """pool -> flatten(1) -> fc, fused into a single Pallas kernel call.

    TODO(synk): for best latency fuse this call right behind the backbone's
    last stage (or batch many frames per call) so x_feat does not round-trip
    HBM as a separate custom-call operand.
    """
    B, Cb, Hf, Wf = x_feat.shape
    HW = Hf * Wf
    x3 = x_feat.reshape(B, Cb, HW)              # contiguous NCHW reshape (free)

    pc = prep["pool_w"].shape[0]
    K = prep["wb1"].shape[0] - 8
    H = prep["wb1"].shape[1]
    O = prep["wb2"].shape[1]

    # Advisory cost so XLA can schedule/overlap the tiny head with other work.
    itemsize = jnp.dtype(x_feat.dtype).itemsize
    flops = 2 * B * (pc * Cb * HW + K * H + H * O)
    bytes_accessed = itemsize * B * (Cb * HW + O) + sum(
        int(prep[n].size) * jnp.dtype(prep[n].dtype).itemsize
        for n in ("pool_w", "wb1", "wb2"))
    cost = pl.CostEstimate(flops=flops, transcendentals=0,
                           bytes_accessed=bytes_accessed)

    vmem = pl.BlockSpec(memory_space=pltpu.MemorySpace.VMEM)
    # Single grid point: whole batch + all head weights resident in VMEM; at
    # these sizes the head is launch/DMA-latency bound, so one kernel with the
    # minimum operand count is the win.
    # TODO(synk): if fc_hidden_size / pc*HW ever grow enough to matter, add a
    # grid with the K-reduction axis LAST ("arbitrary", f32 VMEM accumulator,
    # pl.when init/finalize), batch axis "parallel" (2 TCs on v7x), lane-aligned
    # tk >= 512, and budget 2 buffers x (B*tk + tk*H) x itemsize under
    # pltpu.CompilerParams(vmem_limit_bytes=...) — v7x has only 64 MiB VMEM.
    return pl.pallas_call(
        _head_kernel,
        out_shape=jax.ShapeDtypeStruct((B, O), x_feat.dtype),
        in_specs=[vmem, vmem, vmem, vmem],
        out_specs=vmem,
        cost_estimate=cost,
    )(x3, prep["pool_w"], prep["wb1"], prep["wb2"])


# ----------------------------- pure-JAX reference ----------------------------

def regression_net_ref(x_feat, p):
    pooled = (jnp.einsum("pc,bchw->bphw", p["pool_w"], x_feat)
              + p["pool_b"][None, :, None, None])
    fea = pooled.reshape(x_feat.shape[0], -1)                  # torch flatten(1)
    h = jnp.maximum(fea @ p["fc1_w"].T + p["fc1_b"], 0.0)
    return h @ p["fc2_w"].T + p["fc2_b"]


# --------------------------------- main ---------------------------------------

if __name__ == "__main__":
    # Small, forward-consistent configuration (see RegressionNet.__init__).
    input_shape = (3, 16, 16)          # (C, H, W) of the original image
    reduction_factor = 4               # backbone.reduction_factor
    backbone_out_channels = 8          # backbone.out_channels[-1]
    anchors = 8
    pool_channels = 4
    fc_hidden_size = 32
    batch = 8                          # >= 8 frames/call amortizes the launch cost

    Hf = math.ceil(input_shape[1] / reduction_factor)    # 4
    Wf = math.ceil(input_shape[2] / reduction_factor)    # 4
    HW = Hf * Wf                                          # 16
    flat_dim = pool_channels * HW                         # 64
    out_dim = anchors * 2 + 1                             # 17

    key = jax.random.PRNGKey(0)
    k_x, k_pw, k_pb, k_w1, k_b1, k_w2, k_b2 = jax.random.split(key, 7)

    # Backbone feature map (kernel input).  TODO(synk): external backbone.
    x_feat = jax.random.normal(
        k_x, (batch, backbone_out_channels, Hf, Wf), dtype=jnp.float32)

    # Deterministic synthetic parameters (1x1 conv weight stored as (pc, Cb)).
    params = {
        "pool_w": 0.1 * jax.random.normal(
            k_pw, (pool_channels, backbone_out_channels), jnp.float32),
        "pool_b": 0.1 * jax.random.normal(k_pb, (pool_channels,), jnp.float32),
        "fc1_w": 0.1 * jax.random.normal(
            k_w1, (fc_hidden_size, flat_dim), jnp.float32),
        "fc1_b": 0.1 * jax.random.normal(k_b1, (fc_hidden_size,), jnp.float32),
        "fc2_w": 0.1 * jax.random.normal(
            k_w2, (out_dim, fc_hidden_size), jnp.float32),
        "fc2_b": 0.1 * jax.random.normal(k_b2, (out_dim,), jnp.float32),
    }

    # One-time prep (bias fold + pack + pre-transpose), outside the hot path.
    # Use param_dtype=jnp.bfloat16 for deployment-sized heads.
    prep = prepare_head_params(params)
    prep = jax.tree_util.tree_map(jax.block_until_ready, prep)

    fwd = jax.jit(regression_net_forward)
    reg = jax.block_until_ready(fwd(x_feat, prep))

    ref = regression_net_ref(x_feat, params)
    assert reg.shape == (batch, out_dim), reg.shape
    assert jnp.allclose(reg, ref, atol=1e-4, rtol=1e-4), "mismatch vs reference"

    print("KERNEL_OK")
</pallas_src>

<mosaic_0001>
module attributes {stable_mosaic.version = 11 : i64} {
  func.func @_head_kernel(%arg0: memref<8x8x16xf32, #tpu.memory_space<vmem>>, %arg1: memref<4x8xf32, #tpu.memory_space<vmem>>, %arg2: memref<72x32xf32, #tpu.memory_space<vmem>>, %arg3: memref<40x17xf32, #tpu.memory_space<vmem>>, %arg4: memref<8x17xf32, #tpu.memory_space<vmem>>) attributes {dimension_semantics = [], scalar_prefetch = 0 : i64, scratch_operands = 0 : i64, tpu.core_type = #tpu.core_type<tc>} {
    %c0 = arith.constant 0 : index
    %c0_0 = arith.constant 0 : index
    %c0_1 = arith.constant 0 : index
    %0 = vector.load %arg0[%c0, %c0_0, %c0_1] : memref<8x8x16xf32, #tpu.memory_space<vmem>>, vector<8x8x16xf32>
    %c0_2 = arith.constant 0 : index
    %c0_3 = arith.constant 0 : index
    %1 = vector.load %arg1[%c0_2, %c0_3] : memref<4x8xf32, #tpu.memory_space<vmem>>, vector<4x8xf32>
    %c0_4 = arith.constant 0 : index
    %c0_5 = arith.constant 0 : index
    %2 = vector.load %arg2[%c0_4, %c0_5] : memref<72x32xf32, #tpu.memory_space<vmem>>, vector<72x32xf32>
    %c0_6 = arith.constant 0 : index
    %c0_7 = arith.constant 0 : index
    %3 = vector.load %arg3[%c0_6, %c0_7] : memref<40x17xf32, #tpu.memory_space<vmem>>, vector<40x17xf32>
    %4 = vector.shape_cast %1 : vector<4x8xf32> to vector<1x4x8xf32>
    %5 = vector.shape_cast %4 : vector<1x4x8xf32> to vector<1x4x8xf32>
    %6 = vector.broadcast %5 : vector<1x4x8xf32> to vector<8x4x8xf32>
    %cst = arith.constant dense<0.000000e+00> : vector<8x4x16xf32>
    %7 = tpu.matmul %6, %0, %cst {dimension_numbers = #tpu.dot_dimension_numbers<[2], [1], [1], [2], [0, 0, 0, 1, 1, 2], [0], [0]>} : vector<8x4x8xf32>, vector<8x8x16xf32>, vector<8x4x16xf32> -> vector<8x4x16xf32>
    %cst_8 = arith.constant 0.000000e+00 : f32
    %8 = vector.broadcast %cst_8 : f32 to vector<8x32xf32>
    %9 = vector.extract_strided_slice %7 {offsets = [0, 0, 0], sizes = [8, 1, 16], strides = [1, 1, 1]} : vector<8x4x16xf32> to vector<8x1x16xf32>
    %10 = vector.shape_cast %9 : vector<8x1x16xf32> to vector<8x16xf32>
    %11 = vector.extract_strided_slice %2 {offsets = [0, 0], sizes = [16, 32], strides = [1, 1]} : vector<72x32xf32> to vector<16x32xf32>
    %cst_9 = arith.constant dense<0.000000e+00> : vector<8x32xf32>
    %12 = tpu.matmul %10, %11, %cst_9 {dimension_numbers = #tpu.dot_dimension_numbers<[1], [0], [0], [1], [0, 0, 1, 1], [], []>} : vector<8x16xf32>, vector<16x32xf32>, vector<8x32xf32> -> vector<8x32xf32>
    %13 = arith.addf %8, %12 : vector<8x32xf32>
    %14 = vector.extract_strided_slice %7 {offsets = [0, 1, 0], sizes = [8, 1, 16], strides = [1, 1, 1]} : vector<8x4x16xf32> to vector<8x1x16xf32>
    %15 = vector.shape_cast %14 : vector<8x1x16xf32> to vector<8x16xf32>
    %16 = vector.extract_strided_slice %2 {offsets = [16, 0], sizes = [16, 32], strides = [1, 1]} : vector<72x32xf32> to vector<16x32xf32>
    %cst_10 = arith.constant dense<0.000000e+00> : vector<8x32xf32>
    %17 = tpu.matmul %15, %16, %cst_10 {dimension_numbers = #tpu.dot_dimension_numbers<[1], [0], [0], [1], [0, 0, 1, 1], [], []>} : vector<8x16xf32>, vector<16x32xf32>, vector<8x32xf32> -> vector<8x32xf32>
    %18 = arith.addf %13, %17 : vector<8x32xf32>
    %19 = vector.extract_strided_slice %7 {offsets = [0, 2, 0], sizes = [8, 1, 16], strides = [1, 1, 1]} : vector<8x4x16xf32> to vector<8x1x16xf32>
    %20 = vector.shape_cast %19 : vector<8x1x16xf32> to vector<8x16xf32>
    %21 = vector.extract_strided_slice %2 {offsets = [32, 0], sizes = [16, 32], strides = [1, 1]} : vector<72x32xf32> to vector<16x32xf32>
    %cst_11 = arith.constant dense<0.000000e+00> : vector<8x32xf32>
    %22 = tpu.matmul %20, %21, %cst_11 {dimension_numbers = #tpu.dot_dimension_numbers<[1], [0], [0], [1], [0, 0, 1, 1], [], []>} : vector<8x16xf32>, vector<16x32xf32>, vector<8x32xf32> -> vector<8x32xf32>
    %23 = arith.addf %18, %22 : vector<8x32xf32>
    %24 = vector.extract_strided_slice %7 {offsets = [0, 3, 0], sizes = [8, 1, 16], strides = [1, 1, 1]} : vector<8x4x16xf32> to vector<8x1x16xf32>
    %25 = vector.shape_cast %24 : vector<8x1x16xf32> to vector<8x16xf32>
    %26 = vector.extract_strided_slice %2 {offsets = [48, 0], sizes = [16, 32], strides = [1, 1]} : vector<72x32xf32> to vector<16x32xf32>
    %cst_12 = arith.constant dense<0.000000e+00> : vector<8x32xf32>
    %27 = tpu.matmul %25, %26, %cst_12 {dimension_numbers = #tpu.dot_dimension_numbers<[1], [0], [0], [1], [0, 0, 1, 1], [], []>} : vector<8x16xf32>, vector<16x32xf32>, vector<8x32xf32> -> vector<8x32xf32>
    %28 = arith.addf %23, %27 : vector<8x32xf32>
    %29 = vector.extract_strided_slice %2 {offsets = [64, 0], sizes = [1, 32], strides = [1, 1]} : vector<72x32xf32> to vector<1x32xf32>
    %30 = vector.broadcast %29 : vector<1x32xf32> to vector<8x32xf32>
    %31 = arith.addf %28, %30 : vector<8x32xf32>
    %cst_13 = arith.constant 0.000000e+00 : f32
    %32 = vector.broadcast %cst_13 : f32 to vector<8x32xf32>
    %33 = arith.maximumf %31, %32 : vector<8x32xf32>
    %34 = vector.extract_strided_slice %3 {offsets = [0, 0], sizes = [32, 17], strides = [1, 1]} : vector<40x17xf32> to vector<32x17xf32>
    %cst_14 = arith.constant dense<0.000000e+00> : vector<8x17xf32>
    %35 = tpu.matmul %33, %34, %cst_14 {dimension_numbers = #tpu.dot_dimension_numbers<[1], [0], [0], [1], [0, 0, 1, 1], [], []>} : vector<8x32xf32>, vector<32x17xf32>, vector<8x17xf32> -> vector<8x17xf32>
    %36 = vector.extract_strided_slice %3 {offsets = [32, 0], sizes = [1, 17], strides = [1, 1]} : vector<40x17xf32> to vector<1x17xf32>
    %37 = vector.broadcast %36 : vector<1x17xf32> to vector<8x17xf32>
    %38 = arith.addf %35, %37 : vector<8x17xf32>
    %c0_15 = arith.constant 0 : index
    %c0_16 = arith.constant 0 : index
    %39 = vector.load %arg4[%c0_15, %c0_16] : memref<8x17xf32, #tpu.memory_space<vmem>>, vector<8x17xf32>
    tpu.vector_store %arg4[%c0_15, %c0_16], %38 {strides = array<i32>} : memref<8x17xf32, #tpu.memory_space<vmem>>, vector<8x17xf32>,
    return
  }
}

</mosaic_0001>

<llo_original>
// kernel: regression_net_forward.1
$region0: #{regression_net_forward.1}
  #allocation0 [shape = 'u32[]', space=smem, size = 0x4, offset = 0x4, fixed_abs, tag = 'smem constant byte address 0x4 - core index']
  #allocation1 [shape = 'u32[72,128]{1,0:T(1,128)}', space=vmem, size = 0x9000, scoped, tag = 'internal scratch']
  %s0 = inlined_call_operand.vmem [shape: f32[8,8,16], index: 0, kind: input, shape index: {}]
  %s1 = inlined_call_operand.vmem [shape: f32[4,8], index: 1, kind: input, shape index: {}]
  %s2 = inlined_call_operand.vmem [shape: f32[72,32], index: 2, kind: input, shape index: {}]
  %s3 = inlined_call_operand.vmem [shape: f32[40,17], index: 3, kind: input, shape index: {}]
  %s4 = inlined_call_operand.hbm [shape: f32[8,17], index: 4, kind: output, shape index: {}]
  %s5 = sld [smem:[#allocation0]]
  $region26: #{regression_net_forward.1} parent=0
    _
  %s7 = ssub.s32 1, %s5
  %s8 = scalar_select 0, %s7, %s5
  $region1: #{regression_net_forward.1} parent=0
    #allocation2 [shape = 'u8[4096]{0}', space=vmem, size = 0x1000, scoped, tag = 'output window, operand 0, single buffered']
    #allocation3 [shape = 's32[1]{0}', space=sflag, size = 0x4, scoped, tag = 'scoped memory for regression_net_forward.1']
    %9 = vsyncpa [#allocation3], 0
    // Predicated region
    $region2: #{regression_net_forward.1} parent=1 // pred_check
      _
    $region3: #{regression_net_forward.1} parent=1 // pred_check_branch
      %11 = sbr.rel (0) target = $region5
    $region4: #{regression_net_forward.1} parent=1 // pred_region
      _
    $region5: #{regression_net_forward.1} parent=1 // pred_fallthru
      _
    // Predicated region
    $region6: #{regression_net_forward.1} parent=1 // pred_check
      _
    $region7: #{regression_net_forward.1} parent=1 // pred_check_branch
      %13 = sbr.rel (0) target = $region9
    $region8: #{regression_net_forward.1} parent=1 // pred_region
      _
    $region9: #{regression_net_forward.1} parent=1 // pred_fallthru
      _
    // Predicated region
    $region10: #{regression_net_forward.1} parent=1 // pred_check
      _
    $region11: #{regression_net_forward.1} parent=1 // pred_check_branch
      %15 = sbr.rel (0) target = $region13
    $region12: #{regression_net_forward.1} parent=1 // pred_region
      _
    $region13: #{regression_net_forward.1} parent=1 // pred_fallthru
      _
    // Predicated region
    $region14: #{regression_net_forward.1} parent=1 // pred_check
      _
    $region15: #{regression_net_forward.1} parent=1 // pred_check_branch
      %17 = sbr.rel (0) target = $region17
    $region16: #{regression_net_forward.1} parent=1 // pred_region
      _
    $region17: #{regression_net_forward.1} parent=1 // pred_fallthru
      _
    %v18 = vld [vmem:[%s0] sm:$0xff]
    %v19 = vld [vmem:[%s0 + $0x8] sm:$0xff]
    %v20 = vld [vmem:[%s0 + $0x10] sm:$0xff]
    %v21 = vld [vmem:[%s0 + $0x18] sm:$0xff]
    %v22 = vld [vmem:[%s0 + $0x20] sm:$0xff]
    %v23 = vld [vmem:[%s0 + $0x28] sm:$0xff]
    %v24 = vld [vmem:[%s0 + $0x30] sm:$0xff]
    %v25 = vld [vmem:[%s0 + $0x38] sm:$0xff]
    %v26 = vld [vmem:[%s1] sm:$0xf]
    %v27 = vld [vmem:[%s2] sm:$0xff]
    %v28 = vld [vmem:[%s2 + $0x8] sm:$0xff]
    %v29 = vld [vmem:[%s2 + $0x10] sm:$0xff]
    %v30 = vld [vmem:[%s2 + $0x18] sm:$0xff]
    %v31 = vld [vmem:[%s2 + $0x20] sm:$0xff]
    %v32 = vld [vmem:[%s2 + $0x28] sm:$0xff]
    %v33 = vld [vmem:[%s2 + $0x30] sm:$0xff]
    %v34 = vld [vmem:[%s2 + $0x38] sm:$0xff]
    %v35 = vld [vmem:[%s2 + $0x40] sm:$0xff]
    %v36 = vld [vmem:[%s3] sm:$0xff]
    %v37 = vld [vmem:[%s3 + $0x8] sm:$0xff]
    %v38 = vld [vmem:[%s3 + $0x10] sm:$0xff]
    %v39 = vld [vmem:[%s3 + $0x18] sm:$0xff]
    %v40 = vld [vmem:[%s3 + $0x20] sm:$0xff]
    %vm41 = vcmask 64512
    %v43 = vsel %vm41, %v26, 0
    %45 = vmatpush.msra.mxu0 0.0
    %46 = vmatpush.msra.mxu0 0.0
    %47 = vmatpush.msra.mxu0 0.0
    %48 = vmatpush.msra.mxu0 0.0
    %49 = vmatpush.msra.mxu0 0.0
    %50 = vmatpush.msra.mxu0 0.0
    %51 = vmatpush.msra.mxu0 0.0
    %52 = vmatpush.msra.mxu0 0.0
    %53 = vmatpush.msra.mxu0 0.0
    %54 = vmatpush.msra.mxu0 0.0
    %55 = vmatpush.msra.mxu0 0.0
    %56 = vmatpush.msra.mxu0 0.0
    %57 = vmatpush.msra.mxu0 0.0
    %58 = vmatpush.msra.mxu0 0.0
    %59 = vmatpush.msra.mxu0 0.0
    %60 = vmatpush.msra.mxu0 %v18
    %61 = vmatmul.f32.gmra.mxu0 %v43
    %v62 = vpop.f32.mrf.mxu0
    %v63 = vadd.f32 0.0, %v62
    %64 = vdwg.mxu0
    %65 = vmatpush.msra.mxu0 0.0
    %66 = vmatpush.msra.mxu0 0.0
    %67 = vmatpush.msra.mxu0 0.0
    %68 = vmatpush.msra.mxu0 0.0
    %69 = vmatpush.msra.mxu0 0.0
    %70 = vmatpush.msra.mxu0 0.0
    %71 = vmatpush.msra.mxu0 0.0
    %72 = vmatpush.msra.mxu0 0.0
    %73 = vmatpush.msra.mxu0 0.0
    %74 = vmatpush.msra.mxu0 0.0
    %75 = vmatpush.msra.mxu0 0.0
    %76 = vmatpush.msra.mxu0 0.0
    %77 = vmatpush.msra.mxu0 0.0
    %78 = vmatpush.msra.mxu0 0.0
    %79 = vmatpush.msra.mxu0 0.0
    %80 = vmatpush.msra.mxu0 %v19
    %81 = vmatmul.f32.gmra.mxu0 %v43
    %v82 = vpop.f32.mrf.mxu0
    %v83 = vadd.f32 0.0, %v82
    %84 = vdwg.mxu0
    %85 = vmatpush.msra.mxu0 0.0
    %86 = vmatpush.msra.mxu0 0.0
    %87 = vmatpush.msra.mxu0 0.0
    %88 = vmatpush.msra.mxu0 0.0
    %89 = vmatpush.msra.mxu0 0.0
    %90 = vmatpush.msra.mxu0 0.0
    %91 = vmatpush.msra.mxu0 0.0
    %92 = vmatpush.msra.mxu0 0.0
    %93 = vmatpush.msra.mxu0 0.0
    %94 = vmatpush.msra.mxu0 0.0
    %95 = vmatpush.msra.mxu0 0.0
    %96 = vmatpush.msra.mxu0 0.0
    %97 = vmatpush.msra.mxu0 0.0
    %98 = vmatpush.msra.mxu0 0.0
    %99 = vmatpush.msra.mxu0 0.0
    %100 = vmatpush.msra.mxu0 %v20
    %101 = vmatmul.f32.gmra.mxu0 %v43
    %v102 = vpop.f32.mrf.mxu0
    %v103 = vadd.f32 0.0, %v102
    %104 = vdwg.mxu0
    %105 = vmatpush.msra.mxu0 0.0
    %106 = vmatpush.msra.mxu0 0.0
    %107 = vmatpush.msra.mxu0 0.0
    %108 = vmatpush.msra.mxu0 0.0
    %109 = vmatpush.msra.mxu0 0.0
    %110 = vmatpush.msra.mxu0 0.0
    %111 = vmatpush.msra.mxu0 0.0
    %112 = vmatpush.msra.mxu0 0.0
    %113 = vmatpush.msra.mxu0 0.0
    %114 = vmatpush.msra.mxu0 0.0
    %115 = vmatpush.msra.mxu0 0.0
    %116 = vmatpush.msra.mxu0 0.0
    %117 = vmatpush.msra.mxu0 0.0
    %118 = vmatpush.msra.mxu0 0.0
    %119 = vmatpush.msra.mxu0 0.0
    %120 = vmatpush.msra.mxu0 %v21
    %121 = vmatmul.f32.gmra.mxu0 %v43
    %v122 = vpop.f32.mrf.mxu0
    %v123 = vadd.f32 0.0, %v122
    %124 = vdwg.mxu0
    %125 = vmatpush.msra.mxu0 0.0
    %126 = vmatpush.msra.mxu0 0.0
    %127 = vmatpush.msra.mxu0 0.0
    %128 = vmatpush.msra.mxu0 0.0
    %129 = vmatpush.msra.mxu0 0.0
    %130 = vmatpush.msra.mxu0 0.0
    %131 = vmatpush.msra.mxu0 0.0
    %132 = vmatpush.msra.mxu0 0.0
    %133 = vmatpush.msra.mxu0 0.0
    %134 = vmatpush.msra.mxu0 0.0
    %135 = vmatpush.msra.mxu0 0.0
    %136 = vmatpush.msra.mxu0 0.0
    %137 = vmatpush.msra.mxu0 0.0
    %138 = vmatpush.msra.mxu0 0.0
    %139 = vmatpush.msra.mxu0 0.0
    %140 = vmatpush.msra.mxu0 %v22
    %141 = vmatmul.f32.gmra.mxu0 %v43
    %v142 = vpop.f32.mrf.mxu0
    %v143 = vadd.f32 0.0, %v142
    %144 = vdwg.mxu0
    %145 = vmatpush.msra.mxu0 0.0
    %146 = vmatpush.msra.mxu0 0.0
    %147 = vmatpush.msra.mxu0 0.0
    %148 = vmatpush.msra.mxu0 0.0
    %149 = vmatpush.msra.mxu0 0.0
    %150 = vmatpush.msra.mxu0 0.0
    %151 = vmatpush.msra.mxu0 0.0
    %152 = vmatpush.msra.mxu0 0.0
    %153 = vmatpush.msra.mxu0 0.0
    %154 = vmatpush.msra.mxu0 0.0
    %155 = vmatpush.msra.mxu0 0.0
    %156 = vmatpush.msra.mxu0 0.0
    %157 = vmatpush.msra.mxu0 0.0
    %158 = vmatpush.msra.mxu0 0.0
    %159 = vmatpush.msra.mxu0 0.0
    %160 = vmatpush.msra.mxu0 %v23
    %161 = vmatmul.f32.gmra.mxu0 %v43
    %v162 = vpop.f32.mrf.mxu0
    %v163 = vadd.f32 0.0, %v162
    %164 = vdwg.mxu0
    %165 = vmatpush.msra.mxu0 0.0
    %166 = vmatpush.msra.mxu0 0.0
    %167 = vmatpush.msra.mxu0 0.0
    %168 = vmatpush.msra.mxu0 0.0
    %169 = vmatpush.msra.mxu0 0.0
    %170 = vmatpush.msra.mxu0 0.0
    %171 = vmatpush.msra.mxu0 0.0
    %172 = vmatpush.msra.mxu0 0.0
    %173 = vmatpush.msra.mxu0 0.0
    %174 = vmatpush.msra.mxu0 0.0
    %175 = vmatpush.msra.mxu0 0.0
    %176 = vmatpush.msra.mxu0 0.0
    %177 = vmatpush.msra.mxu0 0.0
    %178 = vmatpush.msra.mxu0 0.0
    %179 = vmatpush.msra.mxu0 0.0
    %180 = vmatpush.msra.mxu0 %v24
    %181 = vmatmul.f32.gmra.mxu0 %v43
    %v182 = vpop.f32.mrf.mxu0
    %v183 = vadd.f32 0.0, %v182
    %184 = vdwg.mxu0
    %185 = vmatpush.msra.mxu0 0.0
    %186 = vmatpush.msra.mxu0 0.0
    %187 = vmatpush.msra.mxu0 0.0
    %188 = vmatpush.msra.mxu0 0.0
    %189 = vmatpush.msra.mxu0 0.0
    %190 = vmatpush.msra.mxu0 0.0
    %191 = vmatpush.msra.mxu0 0.0
    %192 = vmatpush.msra.mxu0 0.0
    %193 = vmatpush.msra.mxu0 0.0
    %194 = vmatpush.msra.mxu0 0.0
    %195 = vmatpush.msra.mxu0 0.0
    %196 = vmatpush.msra.mxu0 0.0
    %197 = vmatpush.msra.mxu0 0.0
    %198 = vmatpush.msra.mxu0 0.0
    %199 = vmatpush.msra.mxu0 0.0
    %200 = vmatpush.msra.mxu0 %v25
    %201 = vmatmul.f32.gmra.mxu0 %v43
    %v202 = vpop.f32.mrf.mxu0
    %v203 = vadd.f32 0.0, %v202
    %204 = vdwg.mxu0
    %v213 = vrot.slane %v63, 1
    %vm214 = vcmask 1041409
    %v215 = vsel %vm214, %v83, %v213
    %v216 = vrot.slane %v103, 7
    %vm217 = vcmask 1042434
    %v218 = vsel %vm217, %v216, %v215
    %v219 = vrot.slane %v123, 6
    %vm220 = vcmask 1043459
    %v221 = vsel %vm220, %v219, %v218
    %v222 = vrot.slane %v143, 5
    %vm223 = vcmask 1044484
    %v224 = vsel %vm223, %v222, %v221
    %v225 = vrot.slane %v163, 4
    %vm226 = vcmask 1045509
    %v227 = vsel %vm226, %v225, %v224
    %v228 = vrot.slane %v183, 3
    %vm229 = vcmask 1046534
    %v230 = vsel %vm229, %v228, %v227
    %v231 = vrot.slane %v203, 2
    %vm232 = vcmask 1047559
    %v233 = vsel %vm232, %v231, %v230
    %vm234 = vcmask 130048
    %v235 = vsel %vm234, %v233, 0
    %237 = vmatpush.msra.mxu0 0.0
    %238 = vmatpush.msra.mxu0 0.0
    %239 = vmatpush.msra.mxu0 0.0
    %240 = vmatpush.msra.mxu0 0.0
    %241 = vmatpush.msra.mxu0 0.0
    %242 = vmatpush.msra.mxu0 0.0
    %243 = vmatpush.msra.mxu0 0.0
    %244 = vmatpush.msra.mxu0 0.0
    %245 = vmatpush.msra.mxu0 0.0
    %246 = vmatpush.msra.mxu0 0.0
    %247 = vmatpush.msra.mxu0 0.0
    %248 = vmatpush.msra.mxu0 0.0
    %249 = vmatpush.msra.mxu0 0.0
    %250 = vmatpush.msra.mxu0 0.0
    %251 = vmatpush.msra.mxu0 %v30
    %252 = vmatpush.msra.mxu0 %v29
    %253 = vmatmul.f32.gmra.mxu0 %v235
    %v254 = vpop.f32.mrf.mxu0
    %v255 = vadd.f32 0.0, %v254
    %256 = vdwg.mxu0
    %v257 = vrot.slane %v83, 7
    %v258 = vsel %vm214, %v257, %v63
    %v259 = vrot.slane %v103, 6
    %v260 = vsel %vm217, %v259, %v258
    %v261 = vrot.slane %v123, 5
    %v262 = vsel %vm220, %v261, %v260
    %v263 = vrot.slane %v143, 4
    %v264 = vsel %vm223, %v263, %v262
    %v265 = vrot.slane %v163, 3
    %v266 = vsel %vm226, %v265, %v264
    %v267 = vrot.slane %v183, 2
    %v268 = vsel %vm229, %v267, %v266
    %v269 = vrot.slane %v203, 1
    %v270 = vsel %vm232, %v269, %v268
    %v271 = vsel %vm234, %v270, 0
    %273 = vmatpush.msra.mxu0 0.0
    %274 = vmatpush.msra.mxu0 0.0
    %275 = vmatpush.msra.mxu0 0.0
    %276 = vmatpush.msra.mxu0 0.0
    %277 = vmatpush.msra.mxu0 0.0
    %278 = vmatpush.msra.mxu0 0.0
    %279 = vmatpush.msra.mxu0 0.0
    %280 = vmatpush.msra.mxu0 0.0
    %281 = vmatpush.msra.mxu0 0.0
    %282 = vmatpush.msra.mxu0 0.0
    %283 = vmatpush.msra.mxu0 0.0
    %284 = vmatpush.msra.mxu0 0.0
    %285 = vmatpush.msra.mxu0 0.0
    %286 = vmatpush.msra.mxu0 0.0
    %287 = vmatpush.msra.mxu0 %v28
    %288 = vmatpush.msra.mxu0 %v27
    %289 = vmatmul.f32.gmra.mxu0 %v271
    %v290 = vpop.f32.mrf.mxu0
    %v291 = vadd.f32 %v255, %v290
    %292 = vdwg.mxu0
    %v293 = vrot.slane %v63, 2
    %v294 = vrot.slane %v83, 1
    %v295 = vsel %vm214, %v294, %v293
    %v296 = vsel %vm217, %v103, %v295
    %v297 = vrot.slane %v123, 7
    %v298 = vsel %vm220, %v297, %v296
    %v299 = vrot.slane %v143, 6
    %v300 = vsel %vm223, %v299, %v298
    %v301 = vrot.slane %v163, 5
    %v302 = vsel %vm226, %v301, %v300
    %v303 = vrot.slane %v183, 4
    %v304 = vsel %vm229, %v303, %v302
    %v305 = vrot.slane %v203, 3
    %v306 = vsel %vm232, %v305, %v304
    %v307 = vsel %vm234, %v306, 0
    %309 = vmatpush.msra.mxu0 0.0
    %310 = vmatpush.msra.mxu0 0.0
    %311 = vmatpush.msra.mxu0 0.0
    %312 = vmatpush.msra.mxu0 0.0
    %313 = vmatpush.msra.mxu0 0.0
    %314 = vmatpush.msra.mxu0 0.0
    %315 = vmatpush.msra.mxu0 0.0
    %316 = vmatpush.msra.mxu0 0.0
    %317 = vmatpush.msra.mxu0 0.0
    %318 = vmatpush.msra.mxu0 0.0
    %319 = vmatpush.msra.mxu0 0.0
    %320 = vmatpush.msra.mxu0 0.0
    %321 = vmatpush.msra.mxu0 0.0
    %322 = vmatpush.msra.mxu0 0.0
    %323 = vmatpush.msra.mxu0 %v32
    %324 = vmatpush.msra.mxu0 %v31
    %325 = vmatmul.f32.gmra.mxu0 %v307
    %v326 = vpop.f32.mrf.mxu0
    %v327 = vadd.f32 0.0, %v326
    %328 = vdwg.mxu0
    %v329 = vadd.f32 %v291, %v327
    %v330 = vrot.slane %v63, 3
    %v331 = vrot.slane %v83, 2
    %v332 = vsel %vm214, %v331, %v330
    %v333 = vrot.slane %v103, 1
    %v334 = vsel %vm217, %v333, %v332
    %v335 = vsel %vm220, %v123, %v334
    %v336 = vrot.slane %v143, 7
    %v337 = vsel %vm223, %v336, %v335
    %v338 = vrot.slane %v163, 6
    %v339 = vsel %vm226, %v338, %v337
    %v340 = vrot.slane %v183, 5
    %v341 = vsel %vm229, %v340, %v339
    %v342 = vrot.slane %v203, 4
    %v343 = vsel %vm232, %v342, %v341
    %v344 = vsel %vm234, %v343, 0
    %346 = vmatpush.msra.mxu0 0.0
    %347 = vmatpush.msra.mxu0 0.0
    %348 = vmatpush.msra.mxu0 0.0
    %349 = vmatpush.msra.mxu0 0.0
    %350 = vmatpush.msra.mxu0 0.0
    %351 = vmatpush.msra.mxu0 0.0
    %352 = vmatpush.msra.mxu0 0.0
    %353 = vmatpush.msra.mxu0 0.0
    %354 = vmatpush.msra.mxu0 0.0
    %355 = vmatpush.msra.mxu0 0.0
    %356 = vmatpush.msra.mxu0 0.0
    %357 = vmatpush.msra.mxu0 0.0
    %358 = vmatpush.msra.mxu0 0.0
    %359 = vmatpush.msra.mxu0 0.0
    %360 = vmatpush.msra.mxu0 %v34
    %361 = vmatpush.msra.mxu0 %v33
    %362 = vmatmul.f32.gmra.mxu0 %v344
    %v363 = vpop.f32.mrf.mxu0
    %v364 = vadd.f32 0.0, %v363
    %365 = vdwg.mxu0
    %v366 = vadd.f32 %v329, %v364
    %v367 = vperm.slane %v35, 0
    %v368 = vadd.f32 %v366, %v367
    %v369 = vmax.f32 %v368, 0.0
    %v370 = vperm.slane %v40, 0
    %vm371 = vcmask 261120
    %v373 = vsel %vm371, %v369, 0
    %375 = vmatpush.msra.mxu0 0.0
    %376 = vmatpush.msra.mxu0 0.0
    %377 = vmatpush.msra.mxu0 0.0
    %378 = vmatpush.msra.mxu0 0.0
    %379 = vmatpush.msra.mxu0 0.0
    %380 = vmatpush.msra.mxu0 0.0
    %381 = vmatpush.msra.mxu0 0.0
    %382 = vmatpush.msra.mxu0 0.0
    %383 = vmatpush.msra.mxu0 0.0
    %384 = vmatpush.msra.mxu0 0.0
    %385 = vmatpush.msra.mxu0 0.0
    %386 = vmatpush.msra.mxu0 0.0
    %387 = vmatpush.msra.mxu0 %v39
    %388 = vmatpush.msra.mxu0 %v38
    %389 = vmatpush.msra.mxu0 %v37
    %390 = vmatpush.msra.mxu0 %v36
    %391 = vmatmul.f32.gmra.mxu0 %v373
    %v392 = vpop.f32.mrf.mxu0
    %v393 = vadd.f32 %v370, %v392
    %394 = vdwg.mxu0
    %vm395 = vcmask 138240
    %396 = vst.msk [vmem:[#allocation2] sm:$0xff] %vm395, %v393
    // Predicated region
    $region18: #{regression_net_forward.1} parent=1 // pred_check
      _
    $region19: #{regression_net_forward.1} parent=1 // pred_check_branch
      %398 = sbr.rel (0) target = $region21
    $region20: #{regression_net_forward.1} parent=1 // pred_region
      %400 = vsyncadd [#allocation3], 0
      %s402 = sshll.u32 [#allocation2], 4
      %s403 = int_to_ptr.vmem [resolvable:$true] %s402
      %s404 = sshll.u32 %s4, 4
      %s405 = int_to_ptr.hbm [resolvable:$true] %s404
      %407 = dma.vmem_to_hbm [thread:$0]  %s403, 128, %s405, [#allocation3]
    $region21: #{regression_net_forward.1} parent=1 // pred_fallthru
      _
    // Predicated region
    $region22: #{regression_net_forward.1} parent=1 // pred_check
      _
    $region23: #{regression_net_forward.1} parent=1 // pred_check_branch
      %409 = sbr.rel (0) target = $region25
    $region24: #{regression_net_forward.1} parent=1 // pred_region
      %411 = dma.done [#allocation3], 128
    $region25: #{regression_net_forward.1} parent=1 // pred_fallthru
      _
    %412 = vsyncpa [#allocation3], 1

</llo_original>
